<compile_context>
chip_gen: v6e
topology: v6e:2x2x1
jax: 0.10.0
libtpu: 0.0.40
codegen_flags: <defaults>
</compile_context>

<pallas_src>
import functools

import jax
import jax.numpy as jnp
from jax.experimental import pallas as pl
from jax.experimental.pallas import tpu as pltpu

MAX_LAYER = 8
THRESHOLD = 0.7
BETA = 0.995  # only used by update(); forward does not need it

# ~2 MiB blocks: >=85% of HBM roofline on measured streaming kernels, and
# 2 MiB x (2 input + 2 output double buffers) = 8 MiB fits comfortably under
# v5e's 16 MiB scoped-VMEM default as well as v6e/v7x (32 MiB scoped default).
_TARGET_BLOCK_BYTES = 2 << 20
_MIN_BLOCK_BYTES = 512 << 10      # don't split blocks below ~512 KiB
_MIN_GRID_STEPS = 8               # >= 4 pipelined steps per TC on 2-TC v7x


def _sublane_tile(dtype):
    """Rows per native sublane tile: 8 (f32), 16 (bf16/f16), 32 (int8/fp8)."""
    return max(8, 32 // jnp.dtype(dtype).itemsize)


# ---------------------------------------------------------------------------
# General streaming kernel: full (B*L, D) row stream, mask picks lerp vs x.
# ---------------------------------------------------------------------------
def _truncation_rows_kernel(avg_ref, x_ref, o_ref, *, threshold, max_layer,
                            num_layers):
    # avg_ref: (1, D) f32; x_ref / o_ref: (TM, D) rows of the flattened x.
    tm = x_ref.shape[0]
    x = x_ref[...]
    x32 = x.astype(jnp.float32)
    avg32 = avg_ref[...]                                  # (1, D) f32, broadcasts
    interp = (avg32 + jnp.float32(threshold) * (x32 - avg32)).astype(x.dtype)
    if max_layer >= num_layers:
        o_ref[...] = interp                               # every layer truncated
    else:
        # Recover the style-layer index of each row: global_row % num_layers.
        row0 = pl.program_id(0) * tm
        rows = row0 + jax.lax.broadcasted_iota(jnp.int32, (tm, 1), 0)  # (TM, 1)
        valid = (rows % num_layers) < max_layer                        # (TM, 1)
        o_ref[...] = jnp.where(valid, interp, x)


def _pick_block_rows(n_rows, bytes_per_row, dtype):
    """~2 MiB dtype-tile-aligned blocks, >= _MIN_GRID_STEPS steps when the
    ~512 KiB block floor allows it."""
    tile = _sublane_tile(dtype)
    if n_rows <= tile:
        return n_rows                          # single full-extent block (legal)
    bpr = max(1, bytes_per_row)

    def align(r):
        return max(tile, (r // tile) * tile)

    tm_target = align(min(n_rows, max(tile, _TARGET_BLOCK_BYTES // bpr)))
    tm_steps = align(max(tile, n_rows // _MIN_GRID_STEPS))   # >= 8 grid steps
    tm_floor = align(max(tile, _MIN_BLOCK_BYTES // bpr))     # >= ~512 KiB/block
    tm = max(min(tm_target, tm_steps), min(tm_floor, tm_target))
    return min(tm, align(n_rows))


def truncation_forward(x, avg_latent, *, threshold=THRESHOLD,
                       max_layer=MAX_LAYER, block_rows=None):
    """x: (B, L, D) float array, avg_latent: (D,) float array -> (B, L, D)."""
    B, L, D = x.shape
    n_rows = B * L
    itemsize = jnp.dtype(x.dtype).itemsize
    x2d = x.reshape(n_rows, D)                         # contiguous reshape: free
    avg2d = avg_latent.reshape(1, D).astype(jnp.float32)   # keep f32 (exact lerp)

    # TODO(synk): if D were < 128 / not lane-aligned, fold k rows into one
    # lane-dense (n_rows/k, k*D) slab and mask with a 2-D iota; with StyleGAN
    # D >= 128 the plain layout already gives unmasked vst.
    if block_rows is None:
        block_rows = _pick_block_rows(n_rows, D * itemsize, x.dtype)
    tm = int(block_rows)

    kernel = functools.partial(
        _truncation_rows_kernel,
        threshold=float(threshold), max_layer=int(max_layer), num_layers=int(L))

    out2d = pl.pallas_call(
        kernel,
        out_shape=jax.ShapeDtypeStruct((n_rows, D), x.dtype),
        grid_spec=pltpu.PrefetchScalarGridSpec(
            num_scalar_prefetch=0,
            grid=(pl.cdiv(n_rows, tm),),
            in_specs=[
                pl.BlockSpec((1, D), lambda i: (0, 0)),    # avg (f32, resident)
                pl.BlockSpec((tm, D), lambda i: (i, 0)),   # x rows
            ],
            out_specs=pl.BlockSpec((tm, D), lambda i: (i, 0)),
        ),
        input_output_aliases={1: 0},   # x -> out (in-place when caller donates x)
        cost_estimate=pl.CostEstimate(
            flops=3 * n_rows * D,
            transcendentals=0,
            bytes_accessed=2 * n_rows * D * itemsize + D * 4),
        compiler_params=pltpu.CompilerParams(
            dimension_semantics=("parallel",)),
    )(avg2d, x2d)
    return out2d.reshape(B, L, D)


# ---------------------------------------------------------------------------
# Traffic-optimal variant: only touch the first `head` layers, alias x.
# ---------------------------------------------------------------------------
def _truncation_head_kernel(avg_ref, x_ref, o_ref, *, threshold, max_layer):
    # x_ref / o_ref: (TB, head, D); head >= max_layer (padded to sublane tile).
    x = x_ref[...]
    x32 = x.astype(jnp.float32)
    avg32 = avg_ref[...][None]                            # (1, 1, D) f32
    interp = (avg32 + jnp.float32(threshold) * (x32 - avg32)).astype(x.dtype)
    head = x_ref.shape[1]
    if head > max_layer:
        # Padded layers pass x through (they are rewritten with their own
        # values, so the aliased output stays consistent).
        layer = jax.lax.broadcasted_iota(jnp.int32, (1, head, 1), 1)
        interp = jnp.where(layer < max_layer, interp, x)
    o_ref[...] = interp


def truncation_forward_inplace(x, avg_latent, *, threshold=THRESHOLD,
                               max_layer=MAX_LAYER):
    """Reads/writes only the first `max_layer` layers (padded up to the dtype
    sublane tile) and aliases x -> out, so the pass-through tail never moves
    through HBM.  Best used with x donated (otherwise XLA inserts a defensive
    copy; the result stays correct)."""
    B, L, D = x.shape
    max_layer = int(min(max_layer, L))
    if max_layer <= 0:
        return x

    tile = _sublane_tile(x.dtype)
    head = min(L, -(-max_layer // tile) * tile)   # pad to sublane tile (or full L)
    itemsize = jnp.dtype(x.dtype).itemsize
    avg2d = avg_latent.reshape(1, D).astype(jnp.float32)

    bytes_per_item = head * D * itemsize
    tb_target = max(1, min(B, _TARGET_BLOCK_BYTES // max(1, bytes_per_item)))
    tb_steps = max(1, B // _MIN_GRID_STEPS)               # >= 8 grid steps ...
    tb_floor = max(1, min(B, _MIN_BLOCK_BYTES // max(1, bytes_per_item)))
    tb = max(min(tb_target, tb_steps), min(tb_floor, tb_target))  # ... unless < ~512 KiB
    tb = int(min(tb, B))

    kernel = functools.partial(_truncation_head_kernel,
                               threshold=float(threshold),
                               max_layer=max_layer)

    return pl.pallas_call(
        kernel,
        out_shape=jax.ShapeDtypeStruct((B, L, D), x.dtype),
        grid_spec=pltpu.PrefetchScalarGridSpec(
            num_scalar_prefetch=0,
            grid=(pl.cdiv(B, tb),),
            in_specs=[
                pl.BlockSpec((1, D), lambda b: (0, 0)),                # avg (f32)
                pl.BlockSpec((tb, head, D), lambda b: (b, 0, 0)),      # head of x
            ],
            out_specs=pl.BlockSpec((tb, head, D), lambda b: (b, 0, 0)),
        ),
        input_output_aliases={1: 0},   # alias x -> out; tail layers untouched
        cost_estimate=pl.CostEstimate(
            flops=3 * B * head * D,
            transcendentals=0,
            bytes_accessed=2 * B * head * D * itemsize + D * 4),
        compiler_params=pltpu.CompilerParams(
            dimension_semantics=("parallel",)),
    )(avg2d, x)


def truncation_update(avg_latent, last_avg, *, beta=BETA):
    """Buffer update (plain JAX glue; trivial elementwise op, not the hot path)."""
    return beta * avg_latent + (1.0 - beta) * last_avg


def _reference_forward(x, avg_latent, *, threshold=THRESHOLD, max_layer=MAX_LAYER):
    avg = avg_latent.astype(jnp.float32)[None, None, :]
    interp = avg + threshold * (x.astype(jnp.float32) - avg)
    layer_is_valid = (jnp.arange(x.shape[1]) < max_layer)[None, :, None]
    return jnp.where(layer_is_valid, interp.astype(x.dtype), x)


if __name__ == "__main__":
    key = jax.random.PRNGKey(0)
    k_avg, k_x = jax.random.split(key)

    B, L, D = 2, 16, 128   # L > max_layer so both branches are exercised
    avg_latent = jax.random.normal(k_avg, (D,), dtype=jnp.float32)
    x = jax.random.normal(k_x, (B, L, D), dtype=jnp.float32)

    # f32, default max_layer=8 (tile-aligned head).
    ref = _reference_forward(x, avg_latent)
    out = jax.block_until_ready(truncation_forward(x, avg_latent))
    assert out.shape == (B, L, D)
    assert jnp.allclose(out, ref, atol=1e-6, rtol=1e-6), "general kernel mismatch"

    out_ip = jax.block_until_ready(truncation_forward_inplace(x, avg_latent))
    assert out_ip.shape == (B, L, D)
    assert jnp.allclose(out_ip, ref, atol=1e-6, rtol=1e-6), "in-place kernel mismatch"

    # Non-tile-aligned max_layer (padded head path, no full-stream fallback).
    ref10 = _reference_forward(x, avg_latent, max_layer=10)
    out10 = jax.block_until_ready(truncation_forward(x, avg_latent, max_layer=10))
    assert jnp.allclose(out10, ref10, atol=1e-6, rtol=1e-6), "general ml=10 mismatch"
    out10_ip = jax.block_until_ready(
        truncation_forward_inplace(x, avg_latent, max_layer=10))
    assert jnp.allclose(out10_ip, ref10, atol=1e-6, rtol=1e-6), "in-place ml=10 mismatch"

    # bf16 input: avg stays f32 inside the kernel, so it matches the f32 lerp.
    x_bf16 = x.astype(jnp.bfloat16)
    ref_bf16 = _reference_forward(x_bf16, avg_latent)
    out_bf16 = jax.block_until_ready(truncation_forward(x_bf16, avg_latent))
    assert out_bf16.dtype == jnp.bfloat16
    assert jnp.allclose(out_bf16.astype(jnp.float32),
                        ref_bf16.astype(jnp.float32), atol=2e-2, rtol=2e-2), \
        "bf16 kernel mismatch"

    print("KERNEL_OK")
</pallas_src>

<mosaic_0001>
module attributes {stable_mosaic.version = 11 : i64} {
  func.func @_truncation_rows_kernel(%arg0: i32, %arg1: memref<1x128xf32, #tpu.memory_space<vmem>>, %arg2: memref<32x128xf32, #tpu.memory_space<vmem>>, %arg3: memref<32x128xf32, #tpu.memory_space<vmem>>) attributes {dimension_semantics = [#tpu.dimension_semantics<parallel>], iteration_bounds = array<i64: 1>, scalar_prefetch = 0 : i64, scratch_operands = 0 : i64, tpu.core_type = #tpu.core_type<tc>, window_params = [{pipeline_mode = #tpu.pipeline_mode<synchronous>, transform_indices = @transform_0, window_bounds = array<i64: 1, 128>}, {transform_indices = @transform_1, window_bounds = array<i64: 32, 128>}, {transform_indices = @transform_2, window_bounds = array<i64: 32, 128>}]} {
    %c0 = arith.constant 0 : index
    %c0_0 = arith.constant 0 : index
    %0 = vector.load %arg2[%c0, %c0_0] : memref<32x128xf32, #tpu.memory_space<vmem>>, vector<32x128xf32>
    %c0_1 = arith.constant 0 : index
    %c0_2 = arith.constant 0 : index
    %1 = vector.load %arg1[%c0_1, %c0_2] : memref<1x128xf32, #tpu.memory_space<vmem>>, vector<1x128xf32>
    %2 = vector.broadcast %1 : vector<1x128xf32> to vector<32x128xf32>
    %3 = arith.subf %0, %2 : vector<32x128xf32>
    %cst = arith.constant 0.699999988 : f32
    %4 = vector.broadcast %cst : f32 to vector<32x128xf32>
    %5 = arith.mulf %4, %3 : vector<32x128xf32>
    %6 = vector.broadcast %1 : vector<1x128xf32> to vector<32x128xf32>
    %7 = arith.addf %6, %5 : vector<32x128xf32>
    %c32_i32 = arith.constant 32 : i32
    %8 = arith.muli %arg0, %c32_i32 : i32
    %9 = tpu.iota {dimensions = array<i32: 0>} : vector<32x1xi32>
    %10 = vector.broadcast %8 : i32 to vector<32x1xi32>
    %11 = arith.addi %10, %9 : vector<32x1xi32>
    %c16_i32 = arith.constant 16 : i32
    %c0_i32 = arith.constant 0 : i32
    %12 = arith.cmpi eq, %c16_i32, %c0_i32 : i32
    %c1_i32 = arith.constant 1 : i32
    %13 = arith.select %12, %c1_i32, %c16_i32 : i32
    %14 = vector.broadcast %13 : i32 to vector<32x1xi32>
    %15 = arith.remsi %11, %14 : vector<32x1xi32>
    %c0_i32_3 = arith.constant 0 : i32
    %16 = vector.broadcast %c0_i32_3 : i32 to vector<32x1xi32>
    %17 = arith.cmpi ne, %15, %16 : vector<32x1xi32>
    %c0_i32_4 = arith.constant 0 : i32
    %18 = vector.broadcast %c0_i32_4 : i32 to vector<32x1xi32>
    %19 = arith.cmpi slt, %15, %18 : vector<32x1xi32>
    %c0_i32_5 = arith.constant 0 : i32
    %20 = arith.cmpi slt, %13, %c0_i32_5 : i32
    %21 = vector.broadcast %20 : i1 to vector<32x1xi1>
    %22 = vector.broadcast %21 : vector<32x1xi1> to vector<32x1xi1>
    %23 = arith.xori %19, %22 : vector<32x1xi1>
    %24 = arith.andi %23, %17 : vector<32x1xi1>
    %25 = vector.broadcast %13 : i32 to vector<32x1xi32>
    %26 = arith.addi %15, %25 : vector<32x1xi32>
    %27 = arith.select %24, %26, %15 : vector<32x1xi1>, vector<32x1xi32>
    %c8_i32 = arith.constant 8 : i32
    %28 = vector.broadcast %c8_i32 : i32 to vector<32x1xi32>
    %29 = arith.cmpi slt, %27, %28 : vector<32x1xi32>
    %30 = vector.shape_cast %29 : vector<32x1xi1> to vector<32x1xi1>
    %31 = vector.broadcast %30 : vector<32x1xi1> to vector<32x128xi1>
    %32 = arith.select %31, %7, %0 : vector<32x128xi1>, vector<32x128xf32>
    %c0_6 = arith.constant 0 : index
    %c0_7 = arith.constant 0 : index
    %33 = vector.load %arg3[%c0_6, %c0_7] : memref<32x128xf32, #tpu.memory_space<vmem>>, vector<32x128xf32>
    tpu.vector_store %arg3[%c0_6, %c0_7], %32 {strides = array<i32>} : memref<32x128xf32, #tpu.memory_space<vmem>>, vector<32x128xf32>,
    return
  }
  func.func @transform_0(%arg0: i32) -> (i32, i32) {
    %c0_i32 = arith.constant 0 : i32
    %c0_i32_0 = arith.constant 0 : i32
    %c0_i32_1 = arith.constant 0 : i32
    return %c0_i32, %c0_i32_0 : i32, i32
  }
  func.func @transform_1(%arg0: i32) -> (i32, i32) {
    %c0_i32 = arith.constant 0 : i32
    %c0_i32_0 = arith.constant 0 : i32
    return %arg0, %c0_i32 : i32, i32
  }
  func.func @transform_2(%arg0: i32) -> (i32, i32) {
    %c0_i32 = arith.constant 0 : i32
    %c0_i32_0 = arith.constant 0 : i32
    return %arg0, %c0_i32 : i32, i32
  }
}

</mosaic_0001>

<llo_original>
// kernel: tpu_custom_call.1
$region0: #{tpu_custom_call.1}
  #allocation0 [shape = 'u32[]', space=smem, size = 0x4, offset = 0x4, fixed_abs, tag = 'smem constant byte address 0x4 - core index']
  #allocation1 [shape = 'u32[144,128]{1,0:T(1,128)}', space=vmem, size = 0x12000, scoped, tag = 'internal scratch']
  %s0 = inlined_call_operand.vmem [shape: f32[1,128], index: 0, kind: input, shape index: {}]
  %s1 = inlined_call_operand.hbm [shape: f32[32,128], index: 1, kind: input, shape index: {}, may-alias: {1,2}]
  %s2 = inlined_call_operand.hbm [shape: f32[32,128], index: 2, kind: output, shape index: {}, may-alias: {1,2}]
  %s3 = sld [smem:[#allocation0]]
  $region22: #{tpu_custom_call.1} parent=0
    _
  %s5 = ssub.s32 1, %s3
  %s6 = scalar_select 0, %s5, %s3
  $region1: #{tpu_custom_call.1} parent=0
    #allocation2 [shape = 'u8[16384]{0}', space=vmem, size = 0x4000, scoped, tag = 'input window, operand 1, single buffered']
    #allocation3 [shape = 's32[1]{0}', space=sflag, size = 0x4, scoped, tag = 'scoped memory for tpu_custom_call.1']
    #allocation4 [shape = 's32[1]{0}', space=sflag, size = 0x4, scoped, tag = 'scoped memory for tpu_custom_call.1']
    #allocation5 [shape = 'u8[16384]{0}', space=vmem, size = 0x4000, scoped, tag = 'output window, operand 0, single buffered']
    %7 = vsyncpa [#allocation3], 0
    %8 = vsyncpa [#allocation4], 0
    // Predicated region
    $region2: #{tpu_custom_call.1} parent=1 // pred_check
      _
    $region3: #{tpu_custom_call.1} parent=1 // pred_check_branch
      %10 = sbr.rel (0) target = $region5
    $region4: #{tpu_custom_call.1} parent=1 // pred_region
      _
    $region5: #{tpu_custom_call.1} parent=1 // pred_fallthru
      _
    // Predicated region
    $region6: #{tpu_custom_call.1} parent=1 // pred_check
      _
    $region7: #{tpu_custom_call.1} parent=1 // pred_check_branch
      %12 = sbr.rel (0) target = $region9
    $region8: #{tpu_custom_call.1} parent=1 // pred_region
      %s14 = ssub.s32 512, 512
      %15 = vsyncadd [#allocation3], %s14
      %s16 = sshll.u32 [#allocation2], 4
      %s17 = int_to_ptr.vmem [resolvable:$true] %s16
      %22 = dma.hbm_to_vmem [thread:$0]  %s1, 512, %s17, [#allocation3], 128, 128, 8
    $region9: #{tpu_custom_call.1} parent=1 // pred_fallthru
      _
    // Predicated region
    $region10: #{tpu_custom_call.1} parent=1 // pred_check
      _
    $region11: #{tpu_custom_call.1} parent=1 // pred_check_branch
      %24 = sbr.rel (0) target = $region13
    $region12: #{tpu_custom_call.1} parent=1 // pred_region
      %25 = dma.done [#allocation3], 512
    $region13: #{tpu_custom_call.1} parent=1 // pred_fallthru
      _
    %v26 = vld [vmem:[#allocation2] sm:$0xff]
    %v27 = vld [vmem:[#allocation2 + $0x8] sm:$0xff]
    %v28 = vld [vmem:[#allocation2 + $0x10] sm:$0xff]
    %v29 = vld [vmem:[#allocation2 + $0x18] sm:$0xff]
    %v30 = vld [vmem:[%s0] sm:$0x1]
    %v32 = vlaneseq
    %v33 = vshrl.u32 %v32, 7
    %v34 = vsub.s32 0, %v33
    %v35 = vrot.slane %v30, %v34
    %v37 = vsub.f32 %v26, %v35
    %v38 = vsub.f32 %v27, %v35
    %v39 = vsub.f32 %v28, %v35
    %v40 = vsub.f32 %v29, %v35
    %v41 = vmul.f32 %v37, 0.7
    %v42 = vmul.f32 %v38, 0.7
    %v43 = vmul.f32 %v39, 0.7
    %v44 = vmul.f32 %v40, 0.7
    %v45 = vadd.f32 %v35, %v41
    %v46 = vadd.f32 %v35, %v42
    %v47 = vadd.f32 %v35, %v43
    %v48 = vadd.f32 %v35, %v44
    %s49 = smul.u32 0, 32
    %v50 = vlaneseq
    %v51 = vshrl.u32 %v50, 7
    %v52 = vadd.s32 %v51, 8
    %v53 = vadd.s32 %v51, 16
    %v54 = vadd.s32 %v51, 24
    %v55 = vstv %s49
    %v56 = vadd.s32 %v55, %v51
    %v57 = vadd.s32 %v55, %v52
    %v58 = vadd.s32 %v55, %v53
    %v59 = vadd.s32 %v55, %v54
    %vm60 = vcmp.lt.s32.totalorder %v56, 0
    %v61 = vsub.s32 0, %v56
    %v62 = vsel %vm60, %v61, %v56
    %v63 = vshrl.u32 %v62, 4
    %v64 = vand.u32 %v62, 15
    %v65 = vsub.s32 0, %v64
    %v66 = vsel %vm60, %v65, %v64
    %vm67 = vcmp.lt.s32.totalorder %v57, 0
    %v68 = vsub.s32 0, %v57
    %v69 = vsel %vm67, %v68, %v57
    %v70 = vshrl.u32 %v69, 4
    %v71 = vand.u32 %v69, 15
    %v72 = vsub.s32 0, %v71
    %v73 = vsel %vm67, %v72, %v71
    %vm74 = vcmp.lt.s32.totalorder %v58, 0
    %v75 = vsub.s32 0, %v58
    %v76 = vsel %vm74, %v75, %v58
    %v77 = vshrl.u32 %v76, 4
    %v78 = vand.u32 %v76, 15
    %v79 = vsub.s32 0, %v78
    %v80 = vsel %vm74, %v79, %v78
    %vm81 = vcmp.lt.s32.totalorder %v59, 0
    %v82 = vsub.s32 0, %v59
    %v83 = vsel %vm81, %v82, %v59
    %v84 = vshrl.u32 %v83, 4
    %v85 = vand.u32 %v83, 15
    %v86 = vsub.s32 0, %v85
    %v87 = vsel %vm81, %v86, %v85
    %vm88 = vcmp.ne.s32.totalorder %v66, 0
    %vm89 = vcmp.ne.s32.totalorder %v73, 0
    %vm90 = vcmp.ne.s32.totalorder %v80, 0
    %vm91 = vcmp.ne.s32.totalorder %v87, 0
    %vm92 = vcmp.lt.s32.totalorder %v66, 0
    %vm93 = vcmp.lt.s32.totalorder %v73, 0
    %vm94 = vcmp.lt.s32.totalorder %v80, 0
    %vm95 = vcmp.lt.s32.totalorder %v87, 0
    %vm96 = vmand %vm92, %vm88
    %vm97 = vmand %vm93, %vm89
    %vm98 = vmand %vm94, %vm90
    %vm99 = vmand %vm95, %vm91
    %v100 = vadd.s32 %v66, 16
    %v101 = vadd.s32 %v73, 16
    %v102 = vadd.s32 %v80, 16
    %v103 = vadd.s32 %v87, 16
    %v104 = vsel %vm96, %v100, %v66
    %v105 = vsel %vm97, %v101, %v73
    %v106 = vsel %vm98, %v102, %v80
    %v107 = vsel %vm99, %v103, %v87
    %vm108 = vcmp.lt.s32.totalorder %v104, 8
    %vm109 = vcmp.lt.s32.totalorder %v105, 8
    %vm110 = vcmp.lt.s32.totalorder %v106, 8
    %vm111 = vcmp.lt.s32.totalorder %v107, 8
    %v112 = vsel %vm108, 1, 0
    %v113 = vsel %vm109, 1, 0
    %v114 = vsel %vm110, 1, 0
    %v115 = vsel %vm111, 1, 0
    %vm116 = vcmp.eq.s32.totalorder %v112, 1
    %vm117 = vcmp.eq.s32.totalorder %v113, 1
    %vm118 = vcmp.eq.s32.totalorder %v114, 1
    %vm119 = vcmp.eq.s32.totalorder %v115, 1
    %v120 = vsel %vm116, %v45, %v26
    %v121 = vsel %vm117, %v46, %v27
    %v122 = vsel %vm118, %v47, %v28
    %v123 = vsel %vm119, %v48, %v29
    %124 = vst [vmem:[#allocation5] sm:$0xff] %v120
    %125 = vst [vmem:[#allocation5 + $0x8] sm:$0xff] %v121
    %126 = vst [vmem:[#allocation5 + $0x10] sm:$0xff] %v122
    %127 = vst [vmem:[#allocation5 + $0x18] sm:$0xff] %v123
    // Predicated region
    $region14: #{tpu_custom_call.1} parent=1 // pred_check
      _
    $region15: #{tpu_custom_call.1} parent=1 // pred_check_branch
      %129 = sbr.rel (0) target = $region17
    $region16: #{tpu_custom_call.1} parent=1 // pred_region
      %s131 = ssub.s32 512, 512
      %132 = vsyncadd [#allocation4], %s131
      %s133 = sshll.u32 [#allocation5], 4
      %s134 = int_to_ptr.vmem [resolvable:$true] %s133
      %139 = dma.vmem_to_hbm [thread:$0]  %s134, 512, %s2, [#allocation4], 128, 128, 8
    $region17: #{tpu_custom_call.1} parent=1 // pred_fallthru
      _
    // Predicated region
    $region18: #{tpu_custom_call.1} parent=1 // pred_check
      _
    $region19: #{tpu_custom_call.1} parent=1 // pred_check_branch
      %141 = sbr.rel (0) target = $region21
    $region20: #{tpu_custom_call.1} parent=1 // pred_region
      %142 = dma.done [#allocation4], 512
    $region21: #{tpu_custom_call.1} parent=1 // pred_fallthru
      _
    %143 = vsyncpa [#allocation3], 1
    %144 = vsyncpa [#allocation4], 1

</llo_original>
